<compile_context>
chip_gen: v7x
topology: tpu7x:2x2x1
jax: 0.10.0
libtpu: 0.0.40
codegen_flags: <defaults>
</compile_context>

<pallas_src>
import functools

import jax
import jax.numpy as jnp
from jax import lax
from jax.experimental import pallas as pl
from jax.experimental.pallas import tpu as pltpu

_SUBLANE = 8
_LANE = 128


def _device_kind() -> str:
    try:
        return jax.devices()[0].device_kind.lower()
    except Exception:
        return ""


def _tile_budget_bytes(kind: str) -> int:
    # v5e: 16 MiB default scoped VMEM -> ~2 MiB / input / buffer.
    # v6e / v7x: 32 MiB default scoped VMEM -> ~4 MiB / input / buffer
    # (2 inputs x 2 buffers x 4 MiB = 16 MiB, well inside v7x's 64 MiB phys).
    if "v5 lite" in kind or "v5e" in kind or "v5lite" in kind:
        return 2 << 20
    return 4 << 20


def _num_split(kind: str, n_blocks: int) -> int:
    # Only v7x exposes two TensorCores to a single pallas_call; on v5e/v6e
    # the grid is a serial loop and a split would just duplicate DMA.
    if "v7" in kind and n_blocks >= 2:
        return 2
    return 1


def _choose_row_tile(rows: int, cols: int, itemsize: int, budget: int) -> int:
    """Sublane-aligned row tile sized to ~budget bytes of input per buffer."""
    rt = (budget // (itemsize * cols)) // _SUBLANE * _SUBLANE
    rows_up = -(-rows // _SUBLANE) * _SUBLANE
    return max(_SUBLANE, min(rt, rows_up))


def _stce_kernel(invt_ref, x_ref, y_ref, o_ref, *,
                 row_tile, n_rows, n_blocks, t_inner, split):
    if split:
        p = pl.program_id(0)           # core-parallel slice (v7x)
        i = pl.program_id(1)           # sequential reduction step
    else:
        p = 0
        i = pl.program_id(0)

    # Zero this slice's resident accumulator block on its first step.
    @pl.when(i == 0)
    def _():
        o_ref[...] = jnp.zeros_like(o_ref)

    blk = p * t_inner + i

    def _accumulate():
        inv_t = invt_ref[0]
        # NOTE: with C < 128 (e.g. C=32) the class axis under-fills vreg
        # lanes (25% occupancy); the kernel is HBM-bound so this only matters
        # once compute binds.
        # TODO(synk): fold 128//C logical rows into one lane-dense physical
        # row with segmented lane reductions for small class counts.
        x = x_ref[...].astype(jnp.float32)
        ys = y_ref[...].astype(jnp.float32) * inv_t

        # Numerically-stable softmax statistics along the class (lane) axis.
        row_max = jnp.max(ys, axis=-1, keepdims=True)
        e = jnp.exp(ys - row_max)
        denom = jnp.sum(e, axis=-1, keepdims=True)

        logx = jnp.log(x + 1e-10)
        num = jnp.sum(e * logx, axis=-1, keepdims=True)

        # EUP approx reciprocal + one Newton step (per row only -> ~free,
        # avoids a full-precision divide while keeping f32 accuracy).
        r = pl.reciprocal(denom, approx=True)
        r = r * (2.0 - denom * r)
        ce_rows = num * r                                     # (row_tile, 1)

        if n_rows % row_tile != 0:
            # Mask genuine tail rows of the last block.  Keep this a select
            # (not multiply) so NaN/Inf from padded garbage rows is dropped.
            rid = (lax.broadcasted_iota(jnp.int32, (row_tile, 1), 0)
                   + blk * row_tile)
            ce_rows = jnp.where(rid < n_rows, ce_rows, 0.0)

        # Accumulate the step partial onto the resident lane-dense block;
        # the wrapper reads element [p, 0, 0] and applies the negation.
        o_ref[...] += jnp.sum(ce_rows)

    if split:
        # Phantom steps of the core split re-read a clamped block; skip all
        # exp/log/reduce work for them (only their DMA is unavoidable).
        pl.when(blk < n_blocks)(_accumulate)
    else:
        _accumulate()


def soft_target_cross_entropy_loss(x, y, t):
    """Pallas equivalent of -sum(softmax(y / t, -1) * log(x + 1e-10))."""
    assert x.shape == y.shape, "x and y must have the same shape"
    cols = x.shape[-1]
    rows = x.size // cols

    # Collapse leading dims only -- no padding / dtype copies in the wrapper.
    x2 = x.reshape(rows, cols)
    y2 = y.reshape(rows, cols)

    kind = _device_kind()
    itemsize = max(x2.dtype.itemsize, y2.dtype.itemsize)
    row_tile = _choose_row_tile(rows, cols, itemsize, _tile_budget_bytes(kind))
    n_blocks = -(-rows // row_tile)                 # cdiv
    nsplit = _num_split(kind, n_blocks)
    t_inner = -(-n_blocks // nsplit)                # steps per parallel slice

    inv_t = (1.0 / jnp.asarray(t, jnp.float32)).reshape(1)

    kernel = functools.partial(
        _stce_kernel, row_tile=row_tile, n_rows=rows, n_blocks=n_blocks,
        t_inner=t_inner, split=(nsplit > 1))

    if nsplit > 1:
        grid = (nsplit, t_inner)
        # Clamp phantom steps onto the last real block; the kernel skips them.
        data_map = lambda p, i: (jnp.minimum(p * t_inner + i, n_blocks - 1), 0)
        out_map = lambda p, i: (p, 0, 0)
        dim_sem = (getattr(pltpu, "CORE_PARALLEL", "parallel"),
                   getattr(pltpu, "ARBITRARY", "arbitrary"))
    else:
        grid = (t_inner,)
        data_map = lambda i: (i, 0)
        out_map = lambda i: (0, 0, 0)
        dim_sem = (getattr(pltpu, "ARBITRARY", "arbitrary"),)

    # Scoped VMEM: 2 inputs x 2 pipeline buffers x tile + headroom,
    # clamped to [16 MiB, 32 MiB] (safe on v5e/v6e/v7x).
    tile_bytes = row_tile * cols * itemsize
    vmem_limit = int(min(max(2 * 2 * tile_bytes + (8 << 20), 16 << 20), 32 << 20))

    n = x.size
    cost = pl.CostEstimate(
        flops=8 * n,
        transcendentals=2 * n + rows,               # exp + log per elem, recip/row
        bytes_accessed=(x2.size * x2.dtype.itemsize
                        + y2.size * y2.dtype.itemsize
                        + nsplit * _SUBLANE * _LANE * 4),
    )

    partials = pl.pallas_call(
        kernel,
        out_shape=jax.ShapeDtypeStruct((nsplit, _SUBLANE, _LANE), jnp.float32),
        grid_spec=pltpu.PrefetchScalarGridSpec(
            num_scalar_prefetch=0,
            grid=grid,
            in_specs=[
                pl.BlockSpec(memory_space=pltpu.MemorySpace.SMEM),   # 1/t scalar
                pl.BlockSpec((row_tile, cols), data_map),            # x
                pl.BlockSpec((row_tile, cols), data_map),            # y
            ],
            out_specs=pl.BlockSpec((1, _SUBLANE, _LANE), out_map),
        ),
        compiler_params=pltpu.CompilerParams(
            dimension_semantics=dim_sem,
            vmem_limit_bytes=vmem_limit,
        ),
        cost_estimate=cost,
    )(inv_t, x2, y2)

    # Each slice's accumulator is replicated across its block; read one lane.
    return -jnp.sum(partials[:, 0, 0])


if __name__ == "__main__":
    key = jax.random.PRNGKey(0)
    kx, ky = jax.random.split(key)

    # Small shapes implied by the forward: batch=2, seq=8, classes=32.
    batch, seq, classes = 2, 8, 32
    t = 2.0

    # x: probabilities (argument of log), y: soft-target logits.
    x = jax.nn.softmax(
        jax.random.normal(kx, (batch, seq, classes), jnp.float32), axis=-1)
    y = jax.random.normal(ky, (batch, seq, classes), jnp.float32)

    loss = soft_target_cross_entropy_loss(x, y, t)
    loss = jax.block_until_ready(loss)

    # Plain-JAX reference of the PyTorch forward.
    ref = -jnp.sum(jax.nn.softmax(y / t, axis=-1) * jnp.log(x + 1e-10))
    assert jnp.allclose(loss, ref, rtol=1e-4, atol=1e-4), (loss, ref)

    print("KERNEL_OK")
</pallas_src>

<mosaic_0001>
module attributes {stable_mosaic.version = 11 : i64} {
  func.func @_stce_kernel(%arg0: i32, %arg1: memref<1xf32, #tpu.memory_space<smem>>, %arg2: memref<16x32xf32, #tpu.memory_space<vmem>>, %arg3: memref<16x32xf32, #tpu.memory_space<vmem>>, %arg4: memref<1x8x128xf32, #tpu.memory_space<vmem>>) attributes {dimension_semantics = [#tpu.dimension_semantics<arbitrary>], iteration_bounds = array<i64: 1>, scalar_prefetch = 0 : i64, scratch_operands = 0 : i64, tpu.core_type = #tpu.core_type<tc>, window_params = [{transform_indices = @transform_0, window_bounds = array<i64: 1>}, {transform_indices = @transform_1, window_bounds = array<i64: 16, 32>}, {transform_indices = @transform_2, window_bounds = array<i64: 16, 32>}, {pipeline_mode = #tpu.pipeline_mode<synchronous>, transform_indices = @transform_3, window_bounds = array<i64: 1, 8, 128>}]} {
    %c0_i32 = arith.constant 0 : i32
    %0 = arith.cmpi eq, %arg0, %c0_i32 : i32
    %1 = arith.extui %0 : i1 to i32
    %c0_i32_0 = arith.constant 0 : i32
    %2 = arith.cmpi ne, %1, %c0_i32_0 : i32
    scf.if %2 {
      %cst_16 = arith.constant 0.000000e+00 : f32
      %35 = vector.broadcast %cst_16 : f32 to vector<1x8x128xf32>
      %c0_17 = arith.constant 0 : index
      %c0_18 = arith.constant 0 : index
      %c0_19 = arith.constant 0 : index
      %36 = vector.load %arg4[%c0_17, %c0_18, %c0_19] : memref<1x8x128xf32, #tpu.memory_space<vmem>>, vector<1x8x128xf32>
      tpu.vector_store %arg4[%c0_17, %c0_18, %c0_19], %35 {strides = array<i32>} : memref<1x8x128xf32, #tpu.memory_space<vmem>>, vector<1x8x128xf32>,
    } else {
    }
    %c0 = arith.constant 0 : index
    %3 = memref.load %arg1[%c0] : memref<1xf32, #tpu.memory_space<smem>>
    %c0_1 = arith.constant 0 : index
    %c0_2 = arith.constant 0 : index
    %4 = vector.load %arg2[%c0_1, %c0_2] : memref<16x32xf32, #tpu.memory_space<vmem>>, vector<16x32xf32>
    %c0_3 = arith.constant 0 : index
    %c0_4 = arith.constant 0 : index
    %5 = vector.load %arg3[%c0_3, %c0_4] : memref<16x32xf32, #tpu.memory_space<vmem>>, vector<16x32xf32>
    %6 = vector.broadcast %3 : f32 to vector<16x32xf32>
    %7 = arith.mulf %5, %6 : vector<16x32xf32>
    %cst = arith.constant dense<0xFF800000> : vector<16xf32>
    %8 = vector.multi_reduction <maximumf>, %7, %cst [1] : vector<16x32xf32> to vector<16xf32>
    %9 = vector.shape_cast %8 : vector<16xf32> to vector<16x1xf32>
    %10 = vector.broadcast %9 : vector<16x1xf32> to vector<16x32xf32>
    %11 = arith.subf %7, %10 : vector<16x32xf32>
    %12 = math.exp %11 : vector<16x32xf32>
    %cst_5 = arith.constant dense<0.000000e+00> : vector<16xf32>
    %13 = vector.multi_reduction <add>, %12, %cst_5 [1] : vector<16x32xf32> to vector<16xf32>
    %14 = vector.shape_cast %13 : vector<16xf32> to vector<16x1xf32>
    %cst_6 = arith.constant 1.000000e-10 : f32
    %15 = vector.broadcast %cst_6 : f32 to vector<16x32xf32>
    %16 = arith.addf %4, %15 : vector<16x32xf32>
    %17 = math.log %16 : vector<16x32xf32>
    %18 = arith.mulf %12, %17 : vector<16x32xf32>
    %cst_7 = arith.constant dense<0.000000e+00> : vector<16xf32>
    %19 = vector.multi_reduction <add>, %18, %cst_7 [1] : vector<16x32xf32> to vector<16xf32>
    %20 = vector.shape_cast %19 : vector<16xf32> to vector<16x1xf32>
    %21 = tpu.reciprocal %14 {approx = true} : vector<16x1xf32> -> vector<16x1xf32>
    %22 = arith.mulf %14, %21 : vector<16x1xf32>
    %cst_8 = arith.constant 2.000000e+00 : f32
    %23 = vector.broadcast %cst_8 : f32 to vector<16x1xf32>
    %24 = arith.subf %23, %22 : vector<16x1xf32>
    %25 = arith.mulf %21, %24 : vector<16x1xf32>
    %26 = arith.mulf %20, %25 : vector<16x1xf32>
    %c0_9 = arith.constant 0 : index
    %c0_10 = arith.constant 0 : index
    %c0_11 = arith.constant 0 : index
    %27 = vector.load %arg4[%c0_9, %c0_10, %c0_11] : memref<1x8x128xf32, #tpu.memory_space<vmem>>, vector<1x8x128xf32>
    %28 = vector.shape_cast %26 : vector<16x1xf32> to vector<1x16x1xf32>
    %cst_12 = arith.constant dense<0.000000e+00> : vector<1xf32>
    %29 = vector.multi_reduction <add>, %28, %cst_12 [1, 2] : vector<1x16x1xf32> to vector<1xf32>
    %30 = vector.shape_cast %29 : vector<1xf32> to vector<1x1x1xf32>
    %31 = vector.extract %30[0, 0, 0] : f32 from vector<1x1x1xf32>
    %32 = vector.broadcast %31 : f32 to vector<1x8x128xf32>
    %33 = arith.addf %27, %32 : vector<1x8x128xf32>
    %c0_13 = arith.constant 0 : index
    %c0_14 = arith.constant 0 : index
    %c0_15 = arith.constant 0 : index
    %34 = vector.load %arg4[%c0_13, %c0_14, %c0_15] : memref<1x8x128xf32, #tpu.memory_space<vmem>>, vector<1x8x128xf32>
    tpu.vector_store %arg4[%c0_13, %c0_14, %c0_15], %33 {strides = array<i32>} : memref<1x8x128xf32, #tpu.memory_space<vmem>>, vector<1x8x128xf32>,
    return
  }
  func.func @transform_0(%arg0: i32) -> i32 {
    %c0_i32 = arith.constant 0 : i32
    %c0_i32_0 = arith.constant 0 : i32
    return %c0_i32 : i32
  }
  func.func @transform_1(%arg0: i32) -> (i32, i32) {
    %c0_i32 = arith.constant 0 : i32
    %c0_i32_0 = arith.constant 0 : i32
    return %arg0, %c0_i32 : i32, i32
  }
  func.func @transform_2(%arg0: i32) -> (i32, i32) {
    %c0_i32 = arith.constant 0 : i32
    %c0_i32_0 = arith.constant 0 : i32
    return %arg0, %c0_i32 : i32, i32
  }
  func.func @transform_3(%arg0: i32) -> (i32, i32, i32) {
    %c0_i32 = arith.constant 0 : i32
    %c0_i32_0 = arith.constant 0 : i32
    %c0_i32_1 = arith.constant 0 : i32
    %c0_i32_2 = arith.constant 0 : i32
    return %c0_i32, %c0_i32_0, %c0_i32_1 : i32, i32, i32
  }
}

</mosaic_0001>

<llo_original>
// kernel: tpu_custom_call.1
$region0: #{tpu_custom_call.1}
  #allocation0 [shape = 'u32[]', space=smem, size = 0x4, offset = 0x4, fixed_abs, tag = 'smem constant byte address 0x4 - core index']
  #allocation1 [shape = 'u32[144,128]{1,0:T(1,128)}', space=vmem, size = 0x12000, scoped, tag = 'internal scratch']
  #allocation2 [shape = 'f32[1]{0:T(128)S(6)}', space=smem, size = 0x200, scoped, tag = 'scoped memory for tpu_custom_call.1']
  %s0 = inlined_call_operand.<no memory space> [shape: f32[1], index: 0, kind: input, shape index: {}]
  %s1 = inlined_call_operand.hbm [shape: f32[16,32], index: 1, kind: input, shape index: {}]
  %s2 = inlined_call_operand.hbm [shape: f32[16,32], index: 2, kind: input, shape index: {}]
  %s3 = inlined_call_operand.hbm [shape: f32[1,8,128], index: 3, kind: output, shape index: {}]
  %s4 = sld [smem:[#allocation0]]
  $region34: #{tpu_custom_call.1} parent=0
    _
  %s6 = ssub.s32 1, %s4
  %s7 = scalar_select 0, %s6, %s4
  %8 = sst [smem:[#allocation2]] %s0
  $region1: #{tpu_custom_call.1} parent=0
    #allocation3 [shape = 'u8[8192]{0}', space=vmem, size = 0x2000, scoped, tag = 'input window, operand 1, single buffered']
    #allocation4 [shape = 's32[1]{0}', space=sflag, size = 0x4, scoped, tag = 'scoped memory for tpu_custom_call.1']
    #allocation5 [shape = 's32[1]{0}', space=sflag, size = 0x4, scoped, tag = 'scoped memory for tpu_custom_call.1']
    #allocation6 [shape = 'u8[8192]{0}', space=vmem, size = 0x2000, scoped, tag = 'input window, operand 2, single buffered']
    #allocation7 [shape = 's32[1]{0}', space=sflag, size = 0x4, scoped, tag = 'scoped memory for tpu_custom_call.1']
    #allocation8 [shape = 'u8[4096]{0}', space=vmem, size = 0x1000, scoped, tag = 'output window, operand 0, single buffered']
    %9 = vsyncpa [#allocation4], 0
    %10 = vsyncpa [#allocation7], 0
    %11 = vsyncpa [#allocation5], 0
    // Predicated region
    $region2: #{tpu_custom_call.1} parent=1 // pred_check
      _
    $region3: #{tpu_custom_call.1} parent=1 // pred_check_branch
      %13 = sbr.rel (0) target = $region5
    $region4: #{tpu_custom_call.1} parent=1 // pred_region
      _
    $region5: #{tpu_custom_call.1} parent=1 // pred_fallthru
      _
    // Predicated region
    $region6: #{tpu_custom_call.1} parent=1 // pred_check
      _
    $region7: #{tpu_custom_call.1} parent=1 // pred_check_branch
      %15 = sbr.rel (0) target = $region9
    $region8: #{tpu_custom_call.1} parent=1 // pred_region
      %s17 = ssub.s32 256, 256
      %18 = vsyncadd [#allocation4], %s17
      %s19 = sshll.u32 [#allocation3], 4
      %s20 = int_to_ptr.vmem [resolvable:$true] %s19
      %25 = dma.hbm_to_vmem [thread:$0]  %s1, 256, %s20, [#allocation4], 128, 128, 8
    $region9: #{tpu_custom_call.1} parent=1 // pred_fallthru
      _
    // Predicated region
    $region10: #{tpu_custom_call.1} parent=1 // pred_check
      _
    $region11: #{tpu_custom_call.1} parent=1 // pred_check_branch
      %27 = sbr.rel (0) target = $region13
    $region12: #{tpu_custom_call.1} parent=1 // pred_region
      %s29 = ssub.s32 256, 256
      %30 = vsyncadd [#allocation7], %s29
      %s31 = sshll.u32 [#allocation6], 4
      %s32 = int_to_ptr.vmem [resolvable:$true] %s31
      %37 = dma.hbm_to_vmem [thread:$0]  %s2, 256, %s32, [#allocation7], 128, 128, 8
    $region13: #{tpu_custom_call.1} parent=1 // pred_fallthru
      _
    // Predicated region
    $region14: #{tpu_custom_call.1} parent=1 // pred_check
      _
    $region15: #{tpu_custom_call.1} parent=1 // pred_check_branch
      %39 = sbr.rel (0) target = $region17
    $region16: #{tpu_custom_call.1} parent=1 // pred_region
      %40 = dma.done [#allocation4], 256
    $region17: #{tpu_custom_call.1} parent=1 // pred_fallthru
      _
    // Predicated region
    $region18: #{tpu_custom_call.1} parent=1 // pred_check
      _
    $region19: #{tpu_custom_call.1} parent=1 // pred_check_branch
      %42 = sbr.rel (0) target = $region21
    $region20: #{tpu_custom_call.1} parent=1 // pred_region
      %43 = dma.done [#allocation7], 256
    $region21: #{tpu_custom_call.1} parent=1 // pred_fallthru
      _
    %p44 = scmp.eq.s32.totalorder 0, 0
    // Predicated region
    $region22: #{tpu_custom_call.1} parent=1 // pred_check
      %p45 = pneg %p44
    $region23: #{tpu_custom_call.1} parent=1 // pred_check_branch
      %47 = sbr.rel (%p45) target = $region25
    $region24: #{tpu_custom_call.1} parent=1 // pred_region
      %48 = vst [vmem:[#allocation8] sm:$0xff] 0.0
    $region25: #{tpu_custom_call.1} parent=1 // pred_fallthru
      _
    %s49 = sld [smem:[#allocation2]]
    %v50 = vld [vmem:[#allocation3] sm:$0xff]
    %v51 = vld [vmem:[#allocation3 + $0x8] sm:$0xff]
    %v52 = vld [vmem:[#allocation6] sm:$0xff]
    %v53 = vld [vmem:[#allocation6 + $0x8] sm:$0xff]
    %v54 = vstv %s49
    %v55 = vmul.f32 %v52, %v54
    %v56 = vmul.f32 %v53, %v54
    %vm57 = vcmask 261120
    %v58 = vsel %vm57, %v55, -inf
    %59 = vmax.xlane.f32.xlu0 %v58
    %v60 = vpop.xlane.xlu0 %59
    %v61 = vsel %vm57, %v56, -inf
    %62 = vmax.xlane.f32.xlu0 %v61
    %v63 = vpop.xlane.xlu0 %62
    %v64 = vsub.f32 %v55, %v60
    %v65 = vsub.f32 %v56, %v63
    %v66 = vmul.f32 %v64, 1.442695
    %v67 = vpow.pop %v66
    %v68 = vmul.f32 %v65, 1.442695
    %v69 = vpow.pop %v68
    %v70 = vsel %vm57, %v67, 0.0
    %71 = vadd.xlane.f32.xlu0 %v70
    %v72 = vpop.xlane.xlu0 %71
    %v73 = vsel %vm57, %v69, 0.0
    %74 = vadd.xlane.f32.xlu0 %v73
    %v75 = vpop.xlane.xlu0 %74
    %v76 = vadd.f32 %v50, 1e-10
    %v77 = vadd.f32 %v51, 1e-10
    %v78 = vlog2.pop %v76
    %v79 = vmul.f32 %v78, 0.6931472
    %v80 = vlog2.pop %v77
    %v81 = vmul.f32 %v80, 0.6931472
    %v82 = vmul.f32 %v67, %v79
    %v83 = vmul.f32 %v69, %v81
    %v84 = vsel %vm57, %v82, 0.0
    %85 = vadd.xlane.f32.xlu0 %v84
    %v86 = vpop.xlane.xlu0 %85
    %v87 = vsel %vm57, %v83, 0.0
    %88 = vadd.xlane.f32.xlu0 %v87
    %v89 = vpop.xlane.xlu0 %88
    %v90 = vrcp.pop %v72
    %v91 = vrcp.pop %v75
    %v92 = vmul.f32 %v72, %v90
    %v93 = vmul.f32 %v75, %v91
    %v94 = vsub.f32 2.0, %v92
    %v95 = vsub.f32 2.0, %v93
    %v96 = vmul.f32 %v90, %v94
    %v97 = vmul.f32 %v91, %v95
    %v98 = vmul.f32 %v86, %v96
    %v99 = vmul.f32 %v89, %v97
    %v100 = vld [vmem:[#allocation8] sm:$0xff]
    %vm101 = vcmask 7168
    %v102 = vsel %vm101, %v98, 0.0
    %v103 = vsel %vm101, %v99, 0.0
    %v104 = vadd.f32 %v102, %v103
    %105 = vadd.xlane.f32.xlu0 %v104
    %v106 = vpop.xlane.xlu0 %105
    %v107 = vrot.slane %v106, 4
    %v108 = vadd.f32 %v106, %v107
    %v109 = vrot.slane %v108, 2
    %v110 = vadd.f32 %v108, %v109
    %v111 = vrot.slane %v110, 1
    %v112 = vadd.f32 %v110, %v111
    %s113 = vtos %v112
    %v114 = vstv %s113
    %v115 = vadd.f32 %v100, %v114
    %116 = vst [vmem:[#allocation8] sm:$0xff] %v115
    // Predicated region
    $region26: #{tpu_custom_call.1} parent=1 // pred_check
      _
    $region27: #{tpu_custom_call.1} parent=1 // pred_check_branch
      %118 = sbr.rel (0) target = $region29
    $region28: #{tpu_custom_call.1} parent=1 // pred_region
      %s120 = ssub.s32 128, 128
      %121 = vsyncadd [#allocation5], %s120
      %s123 = sshll.u32 [#allocation8], 4
      %s124 = int_to_ptr.vmem [resolvable:$true] %s123
      %126 = dma.vmem_to_hbm [thread:$0]  %s124, 128, %s3, [#allocation5]
    $region29: #{tpu_custom_call.1} parent=1 // pred_fallthru
      _
    // Predicated region
    $region30: #{tpu_custom_call.1} parent=1 // pred_check
      _
    $region31: #{tpu_custom_call.1} parent=1 // pred_check_branch
      %128 = sbr.rel (0) target = $region33
    $region32: #{tpu_custom_call.1} parent=1 // pred_region
      %129 = dma.done [#allocation5], 128
    $region33: #{tpu_custom_call.1} parent=1 // pred_fallthru
      _
    %130 = vsyncpa [#allocation4], 1
    %131 = vsyncpa [#allocation7], 1
    %132 = vsyncpa [#allocation5], 1

</llo_original>
